<compile_context>
chip_gen: v7x
topology: tpu7x:2x2x1
jax: 0.10.0
libtpu: 0.0.40
codegen_flags: <defaults>
</compile_context>

<pallas_src>
import functools

import jax
import jax.numpy as jnp
from jax.experimental import pallas as pl
from jax.experimental.pallas import tpu as pltpu


def _cross_spatial_attention_kernel(
    g_ref,     # (F_g,  TP)  caller dtype   channel-major pixel tile of gating
    x_ref,     # (F_l,  TP)  caller dtype   channel-major pixel tile of input
    wgT_ref,   # (F_int, F_g) bf16  folded W_g conv+BN weight (transposed)
    wxT_ref,   # (F_int, F_l) bf16  folded W_x conv+BN weight (transposed)
    bgx_ref,   # (F_int, 1) f32     folded bias of W_g plus bias of W_x
    wpsi_ref,  # (F_int, 1) f32     folded psi conv+BN weight (column)
    bpsi_ref,  # (1,)      f32      folded psi bias (SMEM scalar)
    out_ref,   # (F_l,  TP)  x.dtype
):
    x_in = x_ref[...]                        # single vld of the x tile
    x_f32 = x_in.astype(jnp.float32)

    # g1 = BN(Conv1x1(g)) ; x1 = BN(Conv1x1(x))  -- bf16 MXU operands, f32 acc.
    g1 = jnp.dot(wgT_ref[...], g_ref[...].astype(jnp.bfloat16),
                 preferred_element_type=jnp.float32)
    x1 = jnp.dot(wxT_ref[...], x_in.astype(jnp.bfloat16),
                 preferred_element_type=jnp.float32)

    # relu(g1 + x1), with both folded biases added once per tile.
    a = jnp.maximum(g1 + x1 + bgx_ref[...], 0.0)            # (F_int, TP)

    # psi = sigmoid(BN(Conv1x1(a))): output width is 1, so do it as a VPU
    # multiply + XLU sublane reduce instead of wasting an MXU pass.
    psi_logit = jnp.sum(a * wpsi_ref[...], axis=0, keepdims=True) + bpsi_ref[0]
    psi = jax.nn.sigmoid(psi_logit)                          # (1, TP)

    # out = x * psi (psi broadcast over channels along the sublane axis)
    out_ref[...] = (x_f32 * psi).astype(out_ref.dtype)


def _fold_conv_bn(w, b, gamma, beta, mean, var, eps=1e-5):
    """Fold eval-mode BatchNorm into a 1x1 conv.  Returns (W_eff, b_eff) with
    W_eff shaped (C_out, C_in), ready for (C_out, C_in) @ (C_in, P) slabs."""
    scale = gamma / jnp.sqrt(var + eps)                      # (C_out,)
    w2d = w.reshape(w.shape[0], w.shape[1])                  # (C_out, C_in)
    w_eff = scale[:, None] * w2d                             # (C_out, C_in)
    b_eff = scale * (b - mean) + beta                        # (C_out,)
    return w_eff.astype(jnp.float32), b_eff.astype(jnp.float32)


def _vmem_caps():
    """(tile_budget_bytes, vmem_limit_bytes), derived from physical VMEM."""
    try:
        cap = int(pltpu.get_tpu_info().vmem_capacity_bytes)
    except Exception:  # emulator / unknown chip: assume the smallest (v7x, 64 MiB)
        cap = 64 * 1024 * 1024
    return cap // 2, int(cap * 0.75)


def _pick_tile_p(hw, n, bytes_per_px, budget_bytes, target_steps=8):
    """Largest legal pixel tile whose total VMEM footprint (double-buffered
    streams + single-buffered intermediates, `bytes_per_px`) fits the budget,
    while keeping at least `target_steps` grid steps for DMA/compute overlap
    and preferring an even pixel-step count (v7x TensorCore balance)."""
    if hw % 128 != 0:
        return hw                      # only legal block is the full extent
    cands = sorted({t for t in range(128, hw + 1, 128) if hw % t == 0},
                   reverse=True)
    fitting = [t for t in cands if t * bytes_per_px <= budget_bytes]
    if not fitting:
        return cands[-1]               # smallest legal tile; rely on vmem limit

    def steps(t):
        return n * (hw // t)

    # 1) largest tile with enough steps, >=512 lanes, even pixel-axis split
    for t in fitting:
        if steps(t) >= target_steps and t >= 512 and \
                ((hw // t) % 2 == 0 or n % 2 == 0):
            return t
    # 2) relax the even-split / >=512 preferences
    for t in fitting:
        if steps(t) >= target_steps and t >= 512:
            return t
    for t in fitting:
        if steps(t) >= target_steps:
            return t
    # 3) small problem: just take the biggest fitting tile
    return fitting[0]


@functools.partial(jax.jit, static_argnames=("tile_p",))
def cross_spatial_attention(g, x, params, tile_p=None):
    """g: (N, F_g, H, W), x: (N, F_l, H, W)  ->  (N, F_l, H, W) in x.dtype."""
    N, F_g, H, W = g.shape
    _, F_l, _, _ = x.shape
    HW = H * W

    wg, bg = _fold_conv_bn(params["wg"], params["bg"], params["gg"],
                           params["betag"], params["mg"], params["vg"])
    wx, bx = _fold_conv_bn(params["wx"], params["bx"], params["gx"],
                           params["betax"], params["mx"], params["vx"])
    wp, bp = _fold_conv_bn(params["wp"], params["bp"], params["gp"],
                           params["betap"], params["mp"], params["vp"])
    F_int = wg.shape[0]

    # NCHW -> (N, C, H*W): a free reshape, NO transpose, NO dtype cast, NO
    # extra HBM pass.  Kernel streams the caller's dtype (bf16 nets stay bf16).
    g3 = g.reshape(N, F_g, HW)
    x3 = x.reshape(N, F_l, HW)
    out_dtype = x.dtype

    g_isz = jnp.dtype(g.dtype).itemsize
    x_isz = jnp.dtype(x.dtype).itemsize
    o_isz = jnp.dtype(out_dtype).itemsize

    # Per-pixel HBM stream bytes (roofline) and per-pixel VMEM footprint:
    # double-buffered stream tiles + single-buffered in-kernel intermediates
    # (g/x bf16 casts, g1, x1, a in f32, x_f32, psi row).
    stream_bpp = F_g * g_isz + F_l * x_isz + F_l * o_isz
    vmem_bpp = (2 * stream_bpp
                + 2 * (F_g + F_l)            # bf16 MXU operands
                + 4 * (3 * F_int + F_l + 1))  # g1, x1, a, x_f32, psi (f32)

    tile_budget, vmem_limit = _vmem_caps()
    if tile_p is None:
        tile_p = _pick_tile_p(HW, N, vmem_bpp, tile_budget)
    assert HW % tile_p == 0, "H*W must be divisible by tile_p"
    grid = (N, HW // tile_p)

    # Folded parameters, laid out for channel-major slabs.
    wgT = wg.astype(jnp.bfloat16)                 # (F_int, F_g)
    wxT = wx.astype(jnp.bfloat16)                 # (F_int, F_l)
    bgx = (bg + bx).reshape(F_int, 1)             # (F_int, 1) f32
    wpsi = wp.T                                   # (F_int, 1) f32
    bpsi = bp.reshape(1)                          # (1,)       f32 SMEM scalar

    def pix_spec(c):
        return pl.BlockSpec((None, c, tile_p), lambda n, j: (n, 0, j))

    def full_spec(r, c):
        return pl.BlockSpec((r, c), lambda n, j: (0, 0))

    P = N * HW
    cost = pl.CostEstimate(
        flops=2 * P * F_int * (F_g + F_l) + 5 * P * F_int + 3 * P,
        transcendentals=P,                         # sigmoid
        bytes_accessed=P * stream_bpp,
    )

    out3 = pl.pallas_call(
        _cross_spatial_attention_kernel,
        out_shape=jax.ShapeDtypeStruct((N, F_l, HW), out_dtype),
        grid_spec=pltpu.PrefetchScalarGridSpec(
            num_scalar_prefetch=0,
            grid=grid,
            in_specs=[
                pix_spec(F_g),                                   # g slab tile
                pix_spec(F_l),                                   # x slab tile
                full_spec(F_int, F_g),                           # wgT
                full_spec(F_int, F_l),                           # wxT
                full_spec(F_int, 1),                             # bg + bx
                full_spec(F_int, 1),                             # wpsi column
                pl.BlockSpec(memory_space=pltpu.MemorySpace.SMEM),  # bpsi
            ],
            out_specs=pix_spec(F_l),
        ),
        cost_estimate=cost,
        compiler_params=pltpu.CompilerParams(
            dimension_semantics=("parallel", "parallel"),
            vmem_limit_bytes=vmem_limit,
        ),
    )(g3, x3, wgT, wxT, bgx, wpsi, bpsi)

    return out3.reshape(N, F_l, H, W)


def make_params(key, F_g, F_l, F_int):
    """Deterministic synthetic parameters matching the PyTorch module shapes."""
    ks = jax.random.split(key, 6)
    p = {
        # W_g: Conv2d(F_g, F_int, 1) + BatchNorm2d(F_int)
        "wg": 0.1 * jax.random.normal(ks[0], (F_int, F_g, 1, 1), jnp.float32),
        "bg": 0.1 * jax.random.normal(ks[1], (F_int,), jnp.float32),
        "gg": jnp.ones((F_int,), jnp.float32),
        "betag": jnp.zeros((F_int,), jnp.float32),
        "mg": jnp.zeros((F_int,), jnp.float32),
        "vg": jnp.ones((F_int,), jnp.float32),
        # W_x: Conv2d(F_l, F_int, 1) + BatchNorm2d(F_int)
        "wx": 0.1 * jax.random.normal(ks[2], (F_int, F_l, 1, 1), jnp.float32),
        "bx": 0.1 * jax.random.normal(ks[3], (F_int,), jnp.float32),
        "gx": jnp.ones((F_int,), jnp.float32),
        "betax": jnp.zeros((F_int,), jnp.float32),
        "mx": jnp.zeros((F_int,), jnp.float32),
        "vx": jnp.ones((F_int,), jnp.float32),
        # psi: Conv2d(F_int, 1, 1) + BatchNorm2d(1) + Sigmoid
        "wp": 0.1 * jax.random.normal(ks[4], (1, F_int, 1, 1), jnp.float32),
        "bp": 0.1 * jax.random.normal(ks[5], (1,), jnp.float32),
        "gp": jnp.ones((1,), jnp.float32),
        "betap": jnp.zeros((1,), jnp.float32),
        "mp": jnp.zeros((1,), jnp.float32),
        "vp": jnp.ones((1,), jnp.float32),
    }
    return p


def _reference(g, x, params, eps=1e-5):
    """Pure-JAX reference (eval-mode BN) for correctness check."""
    def conv_bn(inp, w, b, gamma, beta, mean, var):
        y = jnp.einsum("nchw,oc->nohw", inp, w.reshape(w.shape[0], w.shape[1])) \
            + b[None, :, None, None]
        scale = gamma / jnp.sqrt(var + eps)
        return scale[None, :, None, None] * (y - mean[None, :, None, None]) \
            + beta[None, :, None, None]

    g1 = conv_bn(g, params["wg"], params["bg"], params["gg"],
                 params["betag"], params["mg"], params["vg"])
    x1 = conv_bn(x, params["wx"], params["bx"], params["gx"],
                 params["betax"], params["mx"], params["vx"])
    psi = jnp.maximum(g1 + x1, 0.0)
    psi = conv_bn(psi, params["wp"], params["bp"], params["gp"],
                  params["betap"], params["mp"], params["vp"])
    psi = jax.nn.sigmoid(psi)
    return x * psi


if __name__ == "__main__":
    key = jax.random.PRNGKey(0)
    k_g, k_x, k_p = jax.random.split(key, 3)

    N, F_g, F_l, F_int, H, W = 2, 4, 4, 8, 16, 16
    g = jax.random.normal(k_g, (N, F_g, H, W), jnp.float32)
    x = jax.random.normal(k_x, (N, F_l, H, W), jnp.float32)
    params = make_params(k_p, F_g, F_l, F_int)

    ref = _reference(g, x, params)

    # f32 streams (same dtype as PyTorch module).
    out = cross_spatial_attention(g, x, params)
    out = jax.block_until_ready(out)
    assert out.shape == (N, F_l, H, W)
    assert out.dtype == x.dtype
    # bf16 MXU operands (f32 accumulation) -> loosened tolerance vs f32 ref.
    err = float(jnp.max(jnp.abs(out - ref)))
    assert jnp.allclose(out, ref, atol=2e-2, rtol=2e-2), f"mismatch: {err}"

    # bf16 streams (the HBM-traffic-halving path for bf16 networks).
    out_bf = cross_spatial_attention(g.astype(jnp.bfloat16),
                                     x.astype(jnp.bfloat16), params)
    out_bf = jax.block_until_ready(out_bf)
    assert out_bf.dtype == jnp.bfloat16 and out_bf.shape == (N, F_l, H, W)
    err_bf = float(jnp.max(jnp.abs(out_bf.astype(jnp.float32) - ref)))
    assert err_bf < 1e-1, f"bf16 mismatch: {err_bf}"

    print("KERNEL_OK")
</pallas_src>

<mosaic_0001>
module attributes {stable_mosaic.version = 11 : i64} {
  func.func @_cross_spatial_attention_kernel(%arg0: i32, %arg1: i32, %arg2: memref<1x4x256xf32, #tpu.memory_space<vmem>>, %arg3: memref<1x4x256xf32, #tpu.memory_space<vmem>>, %arg4: memref<8x4xbf16, #tpu.memory_space<vmem>>, %arg5: memref<8x4xbf16, #tpu.memory_space<vmem>>, %arg6: memref<8x1xf32, #tpu.memory_space<vmem>>, %arg7: memref<8x1xf32, #tpu.memory_space<vmem>>, %arg8: memref<1xf32, #tpu.memory_space<smem>>, %arg9: memref<1x4x256xf32, #tpu.memory_space<vmem>>) attributes {dimension_semantics = [#tpu.dimension_semantics<parallel>, #tpu.dimension_semantics<parallel>], iteration_bounds = array<i64: 2, 1>, scalar_prefetch = 0 : i64, scratch_operands = 0 : i64, tpu.core_type = #tpu.core_type<tc>, window_params = [{transform_indices = @transform_0, window_bounds = array<i64: 1, 4, 256>}, {transform_indices = @transform_1, window_bounds = array<i64: 1, 4, 256>}, {pipeline_mode = #tpu.pipeline_mode<synchronous>, transform_indices = @transform_2, window_bounds = array<i64: 8, 4>}, {pipeline_mode = #tpu.pipeline_mode<synchronous>, transform_indices = @transform_3, window_bounds = array<i64: 8, 4>}, {pipeline_mode = #tpu.pipeline_mode<synchronous>, transform_indices = @transform_4, window_bounds = array<i64: 8, 1>}, {pipeline_mode = #tpu.pipeline_mode<synchronous>, transform_indices = @transform_5, window_bounds = array<i64: 8, 1>}, {transform_indices = @transform_6, window_bounds = array<i64: 1>}, {transform_indices = @transform_7, window_bounds = array<i64: 1, 4, 256>}]} {
    %c0 = arith.constant 0 : index
    %c0_0 = arith.constant 0 : index
    %c0_1 = arith.constant 0 : index
    %0 = vector.load %arg3[%c0, %c0_0, %c0_1] : memref<1x4x256xf32, #tpu.memory_space<vmem>>, vector<1x4x256xf32>
    %1 = vector.shape_cast %0 : vector<1x4x256xf32> to vector<4x256xf32>
    %c0_2 = arith.constant 0 : index
    %c0_3 = arith.constant 0 : index
    %2 = vector.load %arg4[%c0_2, %c0_3] : memref<8x4xbf16, #tpu.memory_space<vmem>>, vector<8x4xbf16>
    %c0_4 = arith.constant 0 : index
    %c0_5 = arith.constant 0 : index
    %c0_6 = arith.constant 0 : index
    %3 = vector.load %arg2[%c0_4, %c0_5, %c0_6] : memref<1x4x256xf32, #tpu.memory_space<vmem>>, vector<1x4x256xf32>
    %4 = vector.shape_cast %3 : vector<1x4x256xf32> to vector<4x256xf32>
    %5 = arith.truncf %4 : vector<4x256xf32> to vector<4x256xbf16>
    %cst = arith.constant dense<0.000000e+00> : vector<8x256xf32>
    %6 = tpu.matmul %2, %5, %cst {dimension_numbers = #tpu.dot_dimension_numbers<[1], [0], [0], [1], [0, 0, 1, 1], [], []>} : vector<8x4xbf16>, vector<4x256xbf16>, vector<8x256xf32> -> vector<8x256xf32>
    %c0_7 = arith.constant 0 : index
    %c0_8 = arith.constant 0 : index
    %7 = vector.load %arg5[%c0_7, %c0_8] : memref<8x4xbf16, #tpu.memory_space<vmem>>, vector<8x4xbf16>
    %8 = arith.truncf %1 : vector<4x256xf32> to vector<4x256xbf16>
    %cst_9 = arith.constant dense<0.000000e+00> : vector<8x256xf32>
    %9 = tpu.matmul %7, %8, %cst_9 {dimension_numbers = #tpu.dot_dimension_numbers<[1], [0], [0], [1], [0, 0, 1, 1], [], []>} : vector<8x4xbf16>, vector<4x256xbf16>, vector<8x256xf32> -> vector<8x256xf32>
    %10 = arith.addf %6, %9 : vector<8x256xf32>
    %c0_10 = arith.constant 0 : index
    %c0_11 = arith.constant 0 : index
    %11 = vector.load %arg6[%c0_10, %c0_11] : memref<8x1xf32, #tpu.memory_space<vmem>>, vector<8x1xf32>
    %12 = vector.broadcast %11 : vector<8x1xf32> to vector<8x256xf32>
    %13 = arith.addf %10, %12 : vector<8x256xf32>
    %cst_12 = arith.constant 0.000000e+00 : f32
    %14 = vector.broadcast %cst_12 : f32 to vector<8x256xf32>
    %15 = arith.maximumf %13, %14 : vector<8x256xf32>
    %c0_13 = arith.constant 0 : index
    %c0_14 = arith.constant 0 : index
    %16 = vector.load %arg7[%c0_13, %c0_14] : memref<8x1xf32, #tpu.memory_space<vmem>>, vector<8x1xf32>
    %17 = vector.broadcast %16 : vector<8x1xf32> to vector<8x256xf32>
    %18 = arith.mulf %15, %17 : vector<8x256xf32>
    %cst_15 = arith.constant dense<0.000000e+00> : vector<256xf32>
    %19 = vector.multi_reduction <add>, %18, %cst_15 [0] : vector<8x256xf32> to vector<256xf32>
    %20 = vector.shape_cast %19 : vector<256xf32> to vector<1x256xf32>
    %c0_16 = arith.constant 0 : index
    %21 = memref.load %arg8[%c0_16] : memref<1xf32, #tpu.memory_space<smem>>
    %22 = vector.broadcast %21 : f32 to vector<1x256xf32>
    %23 = arith.addf %20, %22 : vector<1x256xf32>
    %24 = arith.negf %23 : vector<1x256xf32>
    %25 = math.exp %24 : vector<1x256xf32>
    %cst_17 = arith.constant 1.000000e+00 : f32
    %26 = vector.broadcast %cst_17 : f32 to vector<1x256xf32>
    %27 = arith.addf %26, %25 : vector<1x256xf32>
    %28 = arith.divf %26, %27 : vector<1x256xf32>
    %29 = vector.broadcast %28 : vector<1x256xf32> to vector<4x256xf32>
    %30 = arith.mulf %1, %29 : vector<4x256xf32>
    %c0_18 = arith.constant 0 : index
    %c0_19 = arith.constant 0 : index
    %c0_20 = arith.constant 0 : index
    %31 = vector.load %arg9[%c0_18, %c0_19, %c0_20] : memref<1x4x256xf32, #tpu.memory_space<vmem>>, vector<1x4x256xf32>
    %32 = vector.shape_cast %31 : vector<1x4x256xf32> to vector<4x256xf32>
    %33 = vector.shape_cast %30 : vector<4x256xf32> to vector<1x4x256xf32>
    tpu.vector_store %arg9[%c0_18, %c0_19, %c0_20], %33 {strides = array<i32>} : memref<1x4x256xf32, #tpu.memory_space<vmem>>, vector<1x4x256xf32>,
    return
  }
  func.func @transform_0(%arg0: i32, %arg1: i32) -> (i32, i32, i32) {
    %c0_i32 = arith.constant 0 : i32
    %c0_i32_0 = arith.constant 0 : i32
    return %arg0, %c0_i32, %arg1 : i32, i32, i32
  }
  func.func @transform_1(%arg0: i32, %arg1: i32) -> (i32, i32, i32) {
    %c0_i32 = arith.constant 0 : i32
    %c0_i32_0 = arith.constant 0 : i32
    return %arg0, %c0_i32, %arg1 : i32, i32, i32
  }
  func.func @transform_2(%arg0: i32, %arg1: i32) -> (i32, i32) {
    %c0_i32 = arith.constant 0 : i32
    %c0_i32_0 = arith.constant 0 : i32
    %c0_i32_1 = arith.constant 0 : i32
    return %c0_i32, %c0_i32_0 : i32, i32
  }
  func.func @transform_3(%arg0: i32, %arg1: i32) -> (i32, i32) {
    %c0_i32 = arith.constant 0 : i32
    %c0_i32_0 = arith.constant 0 : i32
    %c0_i32_1 = arith.constant 0 : i32
    return %c0_i32, %c0_i32_0 : i32, i32
  }
  func.func @transform_4(%arg0: i32, %arg1: i32) -> (i32, i32) {
    %c0_i32 = arith.constant 0 : i32
    %c0_i32_0 = arith.constant 0 : i32
    %c0_i32_1 = arith.constant 0 : i32
    return %c0_i32, %c0_i32_0 : i32, i32
  }
  func.func @transform_5(%arg0: i32, %arg1: i32) -> (i32, i32) {
    %c0_i32 = arith.constant 0 : i32
    %c0_i32_0 = arith.constant 0 : i32
    %c0_i32_1 = arith.constant 0 : i32
    return %c0_i32, %c0_i32_0 : i32, i32
  }
  func.func @transform_6(%arg0: i32, %arg1: i32) -> i32 {
    %c0_i32 = arith.constant 0 : i32
    %c0_i32_0 = arith.constant 0 : i32
    return %c0_i32 : i32
  }
  func.func @transform_7(%arg0: i32, %arg1: i32) -> (i32, i32, i32) {
    %c0_i32 = arith.constant 0 : i32
    %c0_i32_0 = arith.constant 0 : i32
    return %arg0, %c0_i32, %arg1 : i32, i32, i32
  }
}

</mosaic_0001>

<llo_original>
// kernel: cross_spatial_attention.1
$region0: #{cross_spatial_attention.1}
  #allocation0 [shape = 'u32[]', space=smem, size = 0x4, offset = 0x4, fixed_abs, tag = 'smem constant byte address 0x4 - core index']
  #allocation1 [shape = 'u32[144,128]{1,0:T(1,128)}', space=vmem, size = 0x12000, scoped, tag = 'internal scratch']
  #allocation2 [shape = 'f32[1]{0:T(128)S(6)}', space=smem, size = 0x200, scoped, tag = 'scoped memory for cross_spatial_attention.1']
  %s0 = inlined_call_operand.vmem [shape: f32[2,4,256], index: 0, kind: input, shape index: {}]
  %s1 = inlined_call_operand.vmem [shape: f32[2,4,256], index: 1, kind: input, shape index: {}]
  %s2 = inlined_call_operand.vmem [shape: bf16[8,4], index: 2, kind: input, shape index: {}]
  %s3 = inlined_call_operand.vmem [shape: bf16[8,4], index: 3, kind: input, shape index: {}]
  %s4 = inlined_call_operand.vmem [shape: f32[8,1], index: 4, kind: input, shape index: {}]
  %s5 = inlined_call_operand.vmem [shape: f32[8,1], index: 5, kind: input, shape index: {}]
  %s6 = inlined_call_operand.<no memory space> [shape: f32[1], index: 6, kind: input, shape index: {}]
  %s7 = inlined_call_operand.vmem [shape: f32[2,4,256], index: 7, kind: output, shape index: {}]
  %s8 = sld [smem:[#allocation0]]
  $region61: #{cross_spatial_attention.1} parent=0
    _
  %s10 = ssub.s32 1, %s8
  %s11 = scalar_select 0, %s10, %s8
  %12 = sst [smem:[#allocation2]] %s6
  loop: start=0, step=1, limit=4
  $region2: #{cross_spatial_attention.1} parent=0 // loop_pre_header
    _
  $region3: #{cross_spatial_attention.1} parent=0 // loop_header
    %s14 = sphi 0, %s18
    %p15 = scmp.ge.s32.totalorder %s14, 4
    %s21 = sphi 0, %s33
    %s22 = sphi 0, %s29
    %s23 = sphi 0, %s21
    %s24 = sphi 0, %s22
    %s25 = sphi 0, %s23
    %s26 = sphi 0, %s24
    %s38 = sphi 0, %s40
    %s41 = sphi 0, %s38
    %s42 = sphi 0, %s41
    %s58 = sphi 0, %s42
    %s66 = sphi 0, %s68
    %s69 = sphi 0, %s66
    %s70 = sphi 0, %s69
    %s86 = sphi 0, %s70
    %s90 = sphi 0, %s90
    %s92 = sphi 0, %s90
    %s93 = sphi 0, %s92
    %s107 = sphi 0, %s93
    %s111 = sphi 0, %s111
    %s113 = sphi 0, %s111
    %s114 = sphi 0, %s113
    %s128 = sphi 0, %s114
    %s132 = sphi 0, %s132
    %s134 = sphi 0, %s132
    %s135 = sphi 0, %s134
    %s149 = sphi 0, %s135
    %s153 = sphi 0, %s153
    %s155 = sphi 0, %s153
    %s156 = sphi 0, %s155
    %s170 = sphi 0, %s156
    %s174 = sphi 0, %s174
    %s176 = sphi 0, %s174
    %s177 = sphi 0, %s176
    %s191 = sphi 0, %s177
    %s199 = sphi 0, %s201
    %s202 = sphi 0, %s199
    %s203 = sphi 0, %s202
    %s219 = sphi 0, %s203
  $region4: #{cross_spatial_attention.1} parent=0 // loop_header_branch
    %17 = sbr.rel (%p15) target = $region8
  $region5: #{cross_spatial_attention.1} parent=0 // loop_body
    %s19 = ssub.s32 %s14, 1
    %s20 = ssub.s32 %s14, 2
    %s27 = sadd.s32 1, %s22
    %p28 = scmp.ge.s32.totalorder %s27, 1
    %s29 = scalar_select %p28, 0, %s27
    %s30 = sadd.s32 1, %s21
    %s31 = scalar_select %p28, %s30, %s21
    %p32 = scmp.ge.s32.totalorder %s31, 2
    %s33 = scalar_select %p32, 0, %s31
    %s34 = ssub.s32 %s21, %s33
    %s35 = ssub.s32 %s22, %s29
    %s36 = sor.u32 %s34, %s35
    %p37 = scmp.eq.s32.totalorder %s36, 0
    %s39 = sadd.s32 %s38, 1
    %s40 = scalar_select %p37, %s38, %s39
    %p43 = pneg %p37
    %p44 = scmp.eq.s32.totalorder %s14, 1
    %p45 = por %p43, %p44
    %p46 = scmp.ne.s32.totalorder %s38, %s41
    %p47 = scmp.eq.s32.totalorder %s14, 0
    %p48 = por %p46, %p47
    %p49 = scmp.ne.s32.totalorder %s38, %s41
    %p50 = scmp.eq.s32.totalorder %s19, 1
    %p51 = por %p49, %p50
    %p52 = scmp.ne.s32.totalorder %s41, %s42
    %p53 = scmp.eq.s32.totalorder %s19, 0
    %p54 = por %p52, %p53
    %p55 = scmp.ne.s32.totalorder %s41, %s42
    %p56 = scmp.eq.s32.totalorder %s20, 1
    %p57 = por %p55, %p56
    %p59 = scmp.ne.s32.totalorder %s42, %s58
    %p60 = scmp.eq.s32.totalorder %s20, 0
    %p61 = por %p59, %p60
    %s62 = ssub.s32 %s21, %s33
    %s63 = ssub.s32 %s22, %s29
    %s64 = sor.u32 %s62, %s63
    %p65 = scmp.eq.s32.totalorder %s64, 0
    %s67 = sadd.s32 %s66, 1
    %s68 = scalar_select %p65, %s66, %s67
    %p71 = pneg %p65
    %p72 = scmp.eq.s32.totalorder %s14, 1
    %p73 = por %p71, %p72
    %p74 = scmp.ne.s32.totalorder %s66, %s69
    %p75 = scmp.eq.s32.totalorder %s14, 0
    %p76 = por %p74, %p75
    %p77 = scmp.ne.s32.totalorder %s66, %s69
    %p78 = scmp.eq.s32.totalorder %s19, 1
    %p79 = por %p77, %p78
    %p80 = scmp.ne.s32.totalorder %s69, %s70
    %p81 = scmp.eq.s32.totalorder %s19, 0
    %p82 = por %p80, %p81
    %p83 = scmp.ne.s32.totalorder %s69, %s70
    %p84 = scmp.eq.s32.totalorder %s20, 1
    %p85 = por %p83, %p84
    %p87 = scmp.ne.s32.totalorder %s70, %s86
    %p88 = scmp.eq.s32.totalorder %s20, 0
    %p89 = por %p87, %p88
    %s91 = sadd.s32 %s90, 1
    %p94 = scmp.eq.s32.totalorder %s14, 1
    %p95 = scmp.ne.s32.totalorder %s90, %s92
    %p96 = scmp.eq.s32.totalorder %s14, 0
    %p97 = por %p95, %p96
    %p98 = scmp.ne.s32.totalorder %s90, %s92
    %p99 = scmp.eq.s32.totalorder %s19, 1
    %p100 = por %p98, %p99
    %p101 = scmp.ne.s32.totalorder %s92, %s93
    %p102 = scmp.eq.s32.totalorder %s19, 0
    %p103 = por %p101, %p102
    %p104 = scmp.ne.s32.totalorder %s92, %s93
    %p105 = scmp.eq.s32.totalorder %s20, 1
    %p106 = por %p104, %p105
    %p108 = scmp.ne.s32.totalorder %s93, %s107
    %p109 = scmp.eq.s32.totalorder %s20, 0
    %p110 = por %p108, %p109
    %s112 = sadd.s32 %s111, 1
    %p115 = scmp.eq.s32.totalorder %s14, 1
    %p116 = scmp.ne.s32.totalorder %s111, %s113
    %p117 = scmp.eq.s32.totalorder %s14, 0
    %p118 = por %p116, %p117
    %p119 = scmp.ne.s32.totalorder %s111, %s113
    %p120 = scmp.eq.s32.totalorder %s19, 1
    %p121 = por %p119, %p120
    %p122 = scmp.ne.s32.totalorder %s113, %s114
    %p123 = scmp.eq.s32.totalorder %s19, 0
    %p124 = por %p122, %p123
    %p125 = scmp.ne.s32.totalorder %s113, %s114
    %p126 = scmp.eq.s32.totalorder %s20, 1
    %p127 = por %p125, %p126
    %p129 = scmp.ne.s32.totalorder %s114, %s128
    %p130 = scmp.eq.s32.totalorder %s20, 0
    %p131 = por %p129, %p130
    %s133 = sadd.s32 %s132, 1
    %p136 = scmp.eq.s32.totalorder %s14, 1
    %p137 = scmp.ne.s32.totalorder %s132, %s134
    %p138 = scmp.eq.s32.totalorder %s14, 0
    %p139 = por %p137, %p138
    %p140 = scmp.ne.s32.totalorder %s132, %s134
    %p141 = scmp.eq.s32.totalorder %s19, 1
    %p142 = por %p140, %p141
    %p143 = scmp.ne.s32.totalorder %s134, %s135
    %p144 = scmp.eq.s32.totalorder %s19, 0
    %p145 = por %p143, %p144
    %p146 = scmp.ne.s32.totalorder %s134, %s135
    %p147 = scmp.eq.s32.totalorder %s20, 1
    %p148 = por %p146, %p147
    %p150 = scmp.ne.s32.totalorder %s135, %s149
    %p151 = scmp.eq.s32.totalorder %s20, 0
    %p152 = por %p150, %p151
    %s154 = sadd.s32 %s153, 1
    %p157 = scmp.eq.s32.totalorder %s14, 1
    %p158 = scmp.ne.s32.totalorder %s153, %s155
    %p159 = scmp.eq.s32.totalorder %s14, 0
    %p160 = por %p158, %p159
    %p161 = scmp.ne.s32.totalorder %s153, %s155
    %p162 = scmp.eq.s32.totalorder %s19, 1
    %p163 = por %p161, %p162
    %p164 = scmp.ne.s32.totalorder %s155, %s156
    %p165 = scmp.eq.s32.totalorder %s19, 0
    %p166 = por %p164, %p165
    %p167 = scmp.ne.s32.totalorder %s155, %s156
    %p168 = scmp.eq.s32.totalorder %s20, 1
    %p169 = por %p167, %p168
    %p171 = scmp.ne.s32.totalorder %s156, %s170
    %p172 = scmp.eq.s32.totalorder %s20, 0
    %p173 = por %p171, %p172
    %s175 = sadd.s32 %s174, 1
    %p178 = scmp.eq.s32.totalorder %s14, 1
    %p179 = scmp.ne.s32.totalorder %s174, %s176
    %p180 = scmp.eq.s32.totalorder %s14, 0
    %p181 = por %p179, %p180
    %p182 = scmp.ne.s32.totalorder %s174, %s176
    %p183 = scmp.eq.s32.totalorder %s19, 1
    %p184 = por %p182, %p183
    %p185 = scmp.ne.s32.totalorder %s176, %s177
    %p186 = scmp.eq.s32.totalorder %s19, 0
    %p187 = por %p185, %p186
    %p188 = scmp.ne.s32.totalorder %s176, %s177
    %p189 = scmp.eq.s32.totalorder %s20, 1
    %p190 = por %p188, %p189
    %p192 = scmp.ne.s32.totalorder %s177, %s191
    %p193 = scmp.eq.s32.totalorder %s20, 0
    %p194 = por %p192, %p193
    %s195 = ssub.s32 %s21, %s33
    %s196 = ssub.s32 %s22, %s29
    %s197 = sor.u32 %s195, %s196
    %p198 = scmp.eq.s32.totalorder %s197, 0
    %s200 = sadd.s32 %s199, 1
    %s201 = scalar_select %p198, %s199, %s200
    %p204 = pneg %p198
    %p205 = scmp.eq.s32.totalorder %s14, 1
    %p206 = por %p204, %p205
    %p207 = scmp.ne.s32.totalorder %s199, %s202
    %p208 = scmp.eq.s32.totalorder %s14, 0
    %p209 = por %p207, %p208
    %p210 = scmp.ne.s32.totalorder %s199, %s202
    %p211 = scmp.eq.s32.totalorder %s19, 1
    %p212 = por %p210, %p211
    %p213 = scmp.ne.s32.totalorder %s202, %s203
    %p214 = scmp.eq.s32.totalorder %s19, 0
    %p215 = por %p213, %p214
    %p216 = scmp.ne.s32.totalorder %s202, %s203
    %p217 = scmp.eq.s32.totalorder %s20, 1
    %p218 = por %p216, %p217
    %p220 = scmp.ne.s32.totalorder %s203, %s219
    %p221 = scmp.eq.s32.totalorder %s20, 0
    %p222 = por %p220, %p221
    %p223 = scmp.le.s32.totalorder 1, %s14
    %p224 = scmp.lt.s32.totalorder %s14, 3
    %p225 = pnand %p223, %p224
    %p226 = pneg %p225
    // Predicated region
    $region9: #{cross_spatial_attention.1} parent=5 // pred_check
      _
    $region10: #{cross_spatial_attention.1} parent=5 // pred_check_branch
      %228 = sbr.rel (%p225) target = $region12
    $region11: #{cross_spatial_attention.1} parent=5 // pred_region
      %s229 = ssub.s32 %s14, 1
      // Predicated region
      $region13: #{cross_spatial_attention.1} parent=11 // pred_check
        %p230 = pneg %p103
      $region14: #{cross_spatial_attention.1} parent=11 // pred_check_branch
        %232 = sbr.rel (%p230) target = $region16
      $region15: #{cross_spatial_attention.1} parent=11 // pred_region
        _
      $region16: #{cross_spatial_attention.1} parent=11 // pred_fallthru
        _
      // Predicated region
      $region17: #{cross_spatial_attention.1} parent=11 // pred_check
        %p233 = pneg %p124
      $region18: #{cross_spatial_attention.1} parent=11 // pred_check_branch
        %235 = sbr.rel (%p233) target = $region20
      $region19: #{cross_spatial_attention.1} parent=11 // pred_region
        _
      $region20: #{cross_spatial_attention.1} parent=11 // pred_fallthru
        _
      // Predicated region
      $region21: #{cross_spatial_attention.1} parent=11 // pred_check
        %p236 = pneg %p145
      $region22: #{cross_spatial_attention.1} parent=11 // pred_check_branch
        %238 = sbr.rel (%p236) target = $region24
      $region23: #{cross_spatial_attention.1} parent=11 // pred_region
        _
      $region24: #{cross_spatial_attention.1} parent=11 // pred_fallthru
        _
      // Predicated region
      $region25: #{cross_spatial_attention.1} parent=11 // pred_check
        %p239 = pneg %p166
      $region26: #{cross_spatial_attention.1} parent=11 // pred_check_branch
        %241 = sbr.rel (%p239) target = $region28
      $region27: #{cross_spatial_attention.1} parent=11 // pred_region
        _
      $region28: #{cross_spatial_attention.1} parent=11 // pred_fallthru
        _
      // Predicated region
      $region29: #{cross_spatial_attention.1} parent=11 // pred_check
        %p242 = pneg %p187
      $region30: #{cross_spatial_attention.1} parent=11 // pred_check_branch
        %244 = sbr.rel (%p242) target = $region32
      $region31: #{cross_spatial_attention.1} parent=11 // pred_region
        _
      $region32: #{cross_spatial_attention.1} parent=11 // pred_fallthru
        _
    $region12: #{cross_spatial_attention.1} parent=5 // pred_fallthru
      _
    %p245 = scmp.lt.s32.totalorder %s14, 2
    // Predicated region
    $region33: #{cross_spatial_attention.1} parent=5 // pred_check
      %p246 = pneg %p245
    $region34: #{cross_spatial_attention.1} parent=5 // pred_check_branch
      %248 = sbr.rel (%p246) target = $region36
    $region35: #{cross_spatial_attention.1} parent=5 // pred_region
      // Predicated region
      $region37: #{cross_spatial_attention.1} parent=35 // pred_check
        %p249 = pneg %p48
      $region38: #{cross_spatial_attention.1} parent=35 // pred_check_branch
        %251 = sbr.rel (%p249) target = $region40
      $region39: #{cross_spatial_attention.1} parent=35 // pred_region
        %s252 = smul.u32 2, %s22
        %p253 = scmp.lt.s32.totalorder %s21, 1
        %s254 = scalar_select %p253, %s21, 1
        %p255 = scmp.lt.s32.totalorder %s252, 1
        %s256 = scalar_select %p255, %s252, 1
        %s257 = smul.addr %s254, 2
        %s258 = sadd.s32 %s256, %s257
        %s259 = smul.addr %s258, 4
        %s260 = scalar_lea.vmem %s0, %s259
        %s261 = smul.u32 2, %s22
      $region40: #{cross_spatial_attention.1} parent=35 // pred_fallthru
        _
      // Predicated region
      $region41: #{cross_spatial_attention.1} parent=35 // pred_check
        %p262 = pneg %p76
      $region42: #{cross_spatial_attention.1} parent=35 // pred_check_branch
        %264 = sbr.rel (%p262) target = $region44
      $region43: #{cross_spatial_attention.1} parent=35 // pred_region
        %s265 = smul.u32 2, %s22
        %p266 = scmp.lt.s32.totalorder %s21, 1
        %s267 = scalar_select %p266, %s21, 1
        %p268 = scmp.lt.s32.totalorder %s265, 1
        %s269 = scalar_select %p268, %s265, 1
        %s270 = smul.addr %s267, 2
        %s271 = sadd.s32 %s269, %s270
        %s272 = smul.addr %s271, 4
        %s273 = scalar_lea.vmem %s1, %s272
        %s274 = smul.u32 2, %s22
      $region44: #{cross_spatial_attention.1} parent=35 // pred_fallthru
        _
    $region36: #{cross_spatial_attention.1} parent=5 // pred_fallthru
      _
    %p275 = scmp.le.s32.totalorder 1, %s14
    %p276 = scmp.lt.s32.totalorder %s14, 3
    %p277 = pnand %p275, %p276
    %p278 = pneg %p277
    // Predicated region
    $region45: #{cross_spatial_attention.1} parent=5 // pred_check
      _
    $region46: #{cross_spatial_attention.1} parent=5 // pred_check_branch
      %280 = sbr.rel (%p277) target = $region48
    $region47: #{cross_spatial_attention.1} parent=5 // pred_region
      %s281 = ssub.s32 %s14, 1
      %s282 = smul.u32 2, %s24
      %p283 = scmp.lt.s32.totalorder %s23, 1
      %s284 = scalar_select %p283, %s23, 1
      %p285 = scmp.lt.s32.totalorder %s282, 1
      %s286 = scalar_select %p285, %s282, 1
      %s287 = smul.addr %s284, 2
      %s288 = sadd.s32 %s286, %s287
      %s289 = smul.addr %s288, 4
      %s290 = scalar_lea.vmem %s0, %s289
      %p291 = pneg %p54
      %p292 = pneg %p51
      %s293 = smul.u32 2, %s24
      %p294 = scmp.lt.s32.totalorder %s23, 1
      %s295 = scalar_select %p294, %s23, 1
      %p296 = scmp.lt.s32.totalorder %s293, 1
      %s297 = scalar_select %p296, %s293, 1
      %s298 = smul.addr %s295, 2
      %s299 = sadd.s32 %s297, %s298
      %s300 = smul.addr %s299, 4
      %s301 = scalar_lea.vmem %s1, %s300
      %p302 = pneg %p82
      %p303 = pneg %p79
      %p304 = pneg %p103
      %p305 = pneg %p100
      %p306 = pneg %p124
      %p307 = pneg %p121
      %p308 = pneg %p145
      %p309 = pneg %p142
      %p310 = pneg %p166
      %p311 = pneg %p163
      %p312 = pneg %p187
      %p313 = pneg %p184
      %p314 = pneg %p215
      %p315 = pneg %p212
      %s316 = smul.u32 2, %s24
      %p317 = scmp.lt.s32.totalorder %s23, 1
      %s318 = scalar_select %p317, %s23, 1
      %p319 = scmp.lt.s32.totalorder %s316, 1
      %s320 = scalar_select %p319, %s316, 1
      %s321 = smul.addr %s318, 2
      %s322 = sadd.s32 %s320, %s321
      %s323 = smul.addr %s322, 4
      %s324 = scalar_lea.vmem %s7, %s323
      %s325 = smul.u32 2, %s24
      %p326 = scmp.lt.s32.totalorder %s23, 1
      %s327 = scalar_select %p326, %s23, 1
      %p328 = scmp.lt.s32.totalorder %s325, 1
      %s329 = scalar_select %p328, %s325, 1
      %s330 = smul.addr %s327, 2
      %s331 = sadd.s32 %s329, %s330
      %s332 = smul.addr %s331, 4
      %s333 = scalar_lea.vmem %s0, %s332
      %s334 = smul.u32 2, %s24
      %s335 = smul.u32 2, %s24
      %p336 = scmp.lt.s32.totalorder %s23, 1
      %s337 = scalar_select %p336, %s23, 1
      %p338 = scmp.lt.s32.totalorder %s335, 1
      %s339 = scalar_select %p338, %s335, 1
      %s340 = smul.addr %s337, 2
      %s341 = sadd.s32 %s339, %s340
      %s342 = smul.addr %s341, 4
      %s343 = scalar_lea.vmem %s1, %s342
      %s344 = smul.u32 2, %s24
      %s345 = smul.u32 2, %s24
      %p346 = scmp.lt.s32.totalorder %s23, 1
      %s347 = scalar_select %p346, %s23, 1
      %p348 = scmp.lt.s32.totalorder %s345, 1
      %s349 = scalar_select %p348, %s345, 1
      %s350 = smul.addr %s347, 2
      %s351 = sadd.s32 %s349, %s350
      %s352 = smul.addr %s351, 4
      %s353 = scalar_lea.vmem %s7, %s352
      %s354 = smul.u32 2, %s24
      %v356 = vld [vmem:[%s343] sm:$0xff]
      %v357 = vld [vmem:[%s2] sm:$0xf]
      %v358 = vld [vmem:[%s333] sm:$0xff]
      %v360 = vcombine.high %v358, %v358
      %v362 = vpack.c.bf16 %v358, %v358
      %v363 = vpack.c.bf16 %v360, %v360
      %v364 = vld [vmem:[%s3] sm:$0xf]
      %v366 = vcombine.high %v356, %v356
      %v368 = vpack.c.bf16 %v356, %v356
      %v369 = vpack.c.bf16 %v366, %v366
      %vm370 = vcmask 31744
      %v372 = vsel %vm370, %v364, 0
      %vm374 = vcmask 1041408
      %v376 = vsel %vm374, %v368, 0
      %v379 = vsel %vm374, %v369, 0
      %381 = vmatprep.subr.bf16.mxu0 %v379
      %382 = vmatpush1.bf16.msra.mxu0 %v376
      %383 = vmatprep.subr.bf16.mxu0 0
      %384 = vmatpush1.bf16.msra.mxu0 0
      %385 = vmatprep.subr.bf16.mxu0 0
      %386 = vmatpush1.bf16.msra.mxu0 0
      %387 = vmatprep.subr.bf16.mxu0 0
      %388 = vmatpush1.bf16.msra.mxu0 0
      %389 = vmatprep.subr.bf16.mxu0 0
      %390 = vmatpush1.bf16.msra.mxu0 0
      %391 = vmatprep.subr.bf16.mxu0 0
      %392 = vmatpush1.bf16.msra.mxu0 0
      %393 = vmatprep.subr.bf16.mxu0 0
      %394 = vmatpush1.bf16.msra.mxu0 0
      %395 = vmatprep.subr.bf16.mxu0 0
      %396 = vmatpush1.bf16.msra.mxu0 0
      %397 = vmatprep.subr.bf16.mxu0 0
      %398 = vmatpush1.bf16.msra.mxu0 0
      %399 = vmatprep.subr.bf16.mxu0 0
      %400 = vmatpush1.bf16.msra.mxu0 0
      %401 = vmatprep.subr.bf16.mxu0 0
      %402 = vmatpush1.bf16.msra.mxu0 0
      %403 = vmatprep.subr.bf16.mxu0 0
      %404 = vmatpush1.bf16.msra.mxu0 0
      %405 = vmatprep.subr.bf16.mxu0 0
      %406 = vmatpush1.bf16.msra.mxu0 0
      %407 = vmatprep.subr.bf16.mxu0 0
      %408 = vmatpush1.bf16.msra.mxu0 0
      %409 = vmatprep.subr.bf16.mxu0 0
      %410 = vmatpush1.bf16.msra.mxu0 0
      %411 = vmatprep.subr.bf16.mxu0 0
      %412 = vmatpush1.bf16.msra.mxu0 0
      %413 = vmatprep.mubr.bf16.mxu0 0
      %414 = vmatmul.mubr.bf16.gmra.mrb[0].mxu0 %v372
      %v415 = vpop.f32.mrb[0].mxu0
      %v416 = vadd.f32 0.0, %v415
      %v417 = vpop.f32.mrb[0].mxu0
      %v418 = vadd.f32 0.0, %v417
      %v419 = vpop.f32.mrb[0].mxu0
      %v420 = vpop.f32.mrb[0].mxu0
      %421 = vdwg.mxu0
      %v423 = vsel %vm370, %v357, 0
      %v426 = vsel %vm374, %v362, 0
      %v429 = vsel %vm374, %v363, 0
      %431 = vmatprep.subr.bf16.mxu0 %v429
      %432 = vmatpush1.bf16.msra.mxu0 %v426
      %433 = vmatprep.subr.bf16.mxu0 0
      %434 = vmatpush1.bf16.msra.mxu0 0
      %435 = vmatprep.subr.bf16.mxu0 0
      %436 = vmatpush1.bf16.msra.mxu0 0
      %437 = vmatprep.subr.bf16.mxu0 0
      %438 = vmatpush1.bf16.msra.mxu0 0
      %439 = vmatprep.subr.bf16.mxu0 0
      %440 = vmatpush1.bf16.msra.mxu0 0
      %441 = vmatprep.subr.bf16.mxu0 0
      %442 = vmatpush1.bf16.msra.mxu0 0
      %443 = vmatprep.subr.bf16.mxu0 0
      %444 = vmatpush1.bf16.msra.mxu0 0
      %445 = vmatprep.subr.bf16.mxu0 0
      %446 = vmatpush1.bf16.msra.mxu0 0
      %447 = vmatprep.subr.bf16.mxu0 0
      %448 = vmatpush1.bf16.msra.mxu0 0
      %449 = vmatprep.subr.bf16.mxu0 0
      %450 = vmatpush1.bf16.msra.mxu0 0
      %451 = vmatprep.subr.bf16.mxu0 0
      %452 = vmatpush1.bf16.msra.mxu0 0
      %453 = vmatprep.subr.bf16.mxu0 0
      %454 = vmatpush1.bf16.msra.mxu0 0
      %455 = vmatprep.subr.bf16.mxu0 0
      %456 = vmatpush1.bf16.msra.mxu0 0
      %457 = vmatprep.subr.bf16.mxu0 0
      %458 = vmatpush1.bf16.msra.mxu0 0
      %459 = vmatprep.subr.bf16.mxu0 0
      %460 = vmatpush1.bf16.msra.mxu0 0
      %461 = vmatprep.subr.bf16.mxu0 0
      %462 = vmatpush1.bf16.msra.mxu0 0
      %463 = vmatprep.mubr.bf16.mxu0 0
      %464 = vmatmul.mubr.bf16.gmra.mrb[0].mxu0 %v423
      %v465 = vpop.f32.mrb[0].mxu0
      %v466 = vadd.f32 %v416, %v465
      %v467 = vpop.f32.mrb[0].mxu0
      %v468 = vadd.f32 %v418, %v467
      %v469 = vpop.f32.mrb[0].mxu0
      %v470 = vpop.f32.mrb[0].mxu0
      %471 = vdwg.mxu0
      %v472 = vld [vmem:[%s4] sm:$0xff]
      %474 = vset.pattern.permute.xlu0 0
      %475 = vperm.xlu0 %474, %v472
      %v476 = vpop.permute.xlu0 %475
      %v478 = vadd.f32 %v466, %v476
      %v479 = vadd.f32 %v468, %v476
      %v480 = vmax.f32 %v478, 0.0
      %v481 = vmax.f32 %v479, 0.0
      %v482 = vld [vmem:[%s5] sm:$0xff]
      %484 = vset.pattern.permute.xlu0 0
      %485 = vperm.xlu0 %484, %v482
      %v486 = vpop.permute.xlu0 %485
      %v488 = vmul.f32 %v480, %v486
      %v489 = vmul.f32 %v481, %v486
      %v490 = vrot.slane %v488, 4
      %v491 = vadd.f32 %v488, %v490
      %v492 = vrot.slane %v491, 2
      %v493 = vadd.f32 %v491, %v492
      %v494 = vrot.slane %v493, 1
      %v495 = vadd.f32 %v493, %v494
      %v496 = vrot.slane %v489, 4
      %v497 = vadd.f32 %v489, %v496
      %v498 = vrot.slane %v497, 2
      %v499 = vadd.f32 %v497, %v498
      %v500 = vrot.slane %v499, 1
      %v501 = vadd.f32 %v499, %v500
      %s502 = sld [smem:[#allocation2]]
      %v503 = vstv %s502
      %v504 = vadd.f32 %v495, %v503
      %v505 = vadd.f32 %v501, %v503
      %v506 = vxor.u32 %v504, 2147483648
      %v507 = vxor.u32 %v505, 2147483648
      %v508 = vmul.f32 %v506, 1.442695
      %v509 = vpow.pop %v508
      %v510 = vmul.f32 %v507, 1.442695
      %v511 = vpow.pop %v510
      %v512 = vadd.f32 %v509, 1.0
      %v513 = vadd.f32 %v511, 1.0
      %v514 = vrcp.pop %v512
      %v515 = vmul.f32 1.0, %v514
      %v516 = vrcp.pop %v513
      %v517 = vmul.f32 1.0, %v516
      %v520 = vcombine.low %v515, %v517
      %v522 = vmul.f32 %v356, %v520
      %523 = vst [vmem:[%s353] sm:$0xff] %v522
      %s524 = smul.u32 2, %s24
      %p525 = scmp.lt.s32.totalorder %s23, 1
      %s526 = scalar_select %p525, %s23, 1
      %p527 = scmp.lt.s32.totalorder %s524, 1
      %s528 = scalar_select %p527, %s524, 1
      %s529 = smul.addr %s526, 2
      %s530 = sadd.s32 %s528, %s529
      %s531 = smul.addr %s530, 4
      %s532 = scalar_lea.vmem %s7, %s531
      // Predicated region
      $region49: #{cross_spatial_attention.1} parent=47 // pred_check
        %p533 = pneg %p212
      $region50: #{cross_spatial_attention.1} parent=47 // pred_check_branch
        %535 = sbr.rel (%p533) target = $region52
      $region51: #{cross_spatial_attention.1} parent=47 // pred_region
        %s536 = smul.u32 2, %s24
      $region52: #{cross_spatial_attention.1} parent=47 // pred_fallthru
        _
    $region48: #{cross_spatial_attention.1} parent=5 // pred_fallthru
      _
    %p537 = scmp.le.s32.totalorder 2, %s14
    // Predicated region
    $region53: #{cross_spatial_attention.1} parent=5 // pred_check
      %p538 = pneg %p537
    $region54: #{cross_spatial_attention.1} parent=5 // pred_check_branch
      %540 = sbr.rel (%p538) target = $region56
    $region55: #{cross_spatial_attention.1} parent=5 // pred_region
      %s541 = ssub.s32 %s14, 2
      // Predicated region
      $region57: #{cross_spatial_attention.1} parent=55 // pred_check
        %p542 = pneg %p218
      $region58: #{cross_spatial_attention.1} parent=55 // pred_check_branch
        %544 = sbr.rel (%p542) target = $region60
      $region59: #{cross_spatial_attention.1} parent=55 // pred_region
        %s545 = smul.u32 2, %s26
        %p546 = scmp.lt.s32.totalorder %s25, 1
        %s547 = scalar_select %p546, %s25, 1
        %p548 = scmp.lt.s32.totalorder %s545, 1
        %s549 = scalar_select %p548, %s545, 1
        %s550 = smul.addr %s547, 2
        %s551 = sadd.s32 %s549, %s550
        %s552 = smul.addr %s551, 4
        %s553 = scalar_lea.vmem %s7, %s552
      $region60: #{cross_spatial_attention.1} parent=55 // pred_fallthru
        _
    $region56: #{cross_spatial_attention.1} parent=5 // pred_fallthru
      _
  $region6: #{cross_spatial_attention.1} parent=0 // loop_footer
    %s18 = sadd.s32 1, %s14
  $region7: #{cross_spatial_attention.1} parent=0 // loop_footer_branch
    %13 = sbr.rel target = $region3
  $region8: #{cross_spatial_attention.1} parent=0 // loop_exit
    _

</llo_original>
